<compile_context>
chip_gen: v7x
topology: tpu7x:2x2x1
jax: 0.10.0
libtpu: 0.0.40
codegen_flags: <defaults>
</compile_context>

<pallas_src>
import jax
import jax.numpy as jnp
from jax import lax
from jax.experimental import pallas as pl
from jax.experimental.pallas import tpu as pltpu

# ---------------- problem sizes ----------------
CIN = 64                                   # in_channels
COUT = 31                                  # out_channels
K = 10                                     # kernel size
STRIDE = 2                                 # |stride|
PAD = 3                                    # |padding|
LIN = 61                                   # input length
LOUT = (LIN - 1) * STRIDE - 2 * PAD + K    # 124
LHALF = LOUT // STRIDE                     # 62 outputs per phase
NTAPS = K // STRIDE + 1                    # 6 window taps (even: 0..4, odd: 1..5)
LANE = 128                                 # lane-dense tile width
ROWS = 2 * COUT                            # 62 used output rows (even | odd)
ROWS_PAD = 64                              # padded to a sublane/MXU friendly 64


def _convt_hardswishish_kernel(x_ref, w_ref, b_ref, o_ref):
    """Fused ConvTranspose1d (phase decomposition) + v1*clamp(v1+3,0,6)/6.

    x_ref : (CIN, LANE)            f32  input, zero-padded in lanes >= LIN
    w_ref : (NTAPS, ROWS_PAD, CIN) f32  per-tap phase-split weights
    b_ref : (ROWS_PAD, 1)          f32  bias (even rows | odd rows | zero pad)
    o_ref : (ROWS_PAD, LANE)       f32  lane-dense output tile:
                                        rows [0:31)  -> even outputs o = 2m
                                        rows [31:62) -> odd  outputs o = 2m+1
                                        cols [0:62)  -> phase position m
    """
    x = x_ref[...]                                   # (CIN, LANE) f32
    acc = jnp.zeros((ROWS_PAD, LANE), jnp.float32)
    for t in range(NTAPS):                           # statically unrolled
        off = PAD - t                                # lane shift: 3,2,1,0,-1,-2
        # tap[:, m] = x[:, m - off] (zero where out of range).  x is
        # zero-padded in lanes [LIN,128), so for off>0 the wrapped-in lanes
        # are zeros; for off<0 the only wrong (wrapped) lanes are m >= 126,
        # which lie beyond LHALF=62 and are discarded by the wrapper slice.
        # -> no masks, no scratch stores; the rotation rides the idle XLU slot.
        tap = x if off == 0 else pltpu.roll(x, shift=off % LANE, axis=1)
        acc = acc + jnp.dot(w_ref[t], tap, preferred_element_type=jnp.float32)
    v1 = acc + b_ref[...]                            # bias broadcast over lanes
    v4 = jnp.clip(v1 + 3.0, 0.0, 6.0)                # clamp(min=0) then clamp(max=6)
    o_ref[...] = v1 * v4 * (1.0 / 6.0)               # one unmasked lane-dense store


def prepare_params(w, b):
    """One-time repack of the PyTorch ConvTranspose1d parameters (hoisted out
    of the jitted forward; weights are static).

    w: (CIN, COUT, K) f32 (PyTorch ConvTranspose1d layout), b: (COUT,) f32.
    Output o = i*STRIDE - PAD + k.  For o = 2m the taps k in {9,7,5,3,1} pair
    with window offsets t=(K-1-k)/2 in {0..4}; for o = 2m+1 the taps
    k in {8,6,4,2,0} pair with t=(K-k)/2 in {1..5}.
    Returned layout: w_stack[t, row, ci], rows = [even chans | odd chans | pad].
    """
    w = jnp.asarray(w, jnp.float32)
    b = jnp.asarray(b, jnp.float32)

    w_stack = jnp.zeros((NTAPS, ROWS_PAD, CIN), jnp.float32)
    for t in range(NTAPS - 1):            # even phase uses taps t = 0..4
        w_stack = w_stack.at[t, 0:COUT, :].set(w[:, :, K - 1 - STRIDE * t].T)
    for t in range(1, NTAPS):             # odd phase uses taps t = 1..5
        w_stack = w_stack.at[t, COUT:ROWS, :].set(w[:, :, K - STRIDE * t].T)

    b_stack = jnp.concatenate(
        [b, b, jnp.zeros((ROWS_PAD - ROWS,), jnp.float32)]
    ).reshape(ROWS_PAD, 1)                            # (64, 1) f32
    return w_stack, b_stack


@jax.jit
def model_forward(x, w_stack, b_stack):
    """x: (1, CIN, LIN) f32; w_stack/b_stack from prepare_params.
    Returns (1, COUT, LOUT) f32."""
    # Lane-pad x to 128 so the kernel's XLU rolls wrap through zeros
    # (tiny pre-plumbing, kept inside the same jit).
    x_pad = jnp.pad(x[0], ((0, 0), (0, LANE - LIN)))          # (CIN, 128)

    cost = pl.CostEstimate(
        flops=2 * NTAPS * ROWS_PAD * CIN * LANE,
        transcendentals=0,
        bytes_accessed=(CIN * LANE * 4 + NTAPS * ROWS_PAD * CIN * 4
                        + ROWS_PAD * 4 + ROWS_PAD * LANE * 4),
    )

    y = pl.pallas_call(
        _convt_hardswishish_kernel,
        out_shape=jax.ShapeDtypeStruct((ROWS_PAD, LANE), jnp.float32),
        in_specs=[
            pl.BlockSpec(memory_space=pltpu.MemorySpace.VMEM),
            pl.BlockSpec(memory_space=pltpu.MemorySpace.VMEM),
            pl.BlockSpec(memory_space=pltpu.MemorySpace.VMEM),
        ],
        out_specs=pl.BlockSpec(memory_space=pltpu.MemorySpace.VMEM),
        cost_estimate=cost,
    )(x_pad, w_stack, b_stack)                                # (64, 128) f32

    # Interleave the two contiguous phase slabs outside the kernel (cheap
    # plumbing in the same jit; lane-strided stores in-kernel would be worse).
    even = y[:COUT, :LHALF]                                   # -> out[:, 0::2]
    odd = y[COUT:ROWS, :LHALF]                                # -> out[:, 1::2]
    out = jnp.stack([even, odd], axis=-1).reshape(COUT, LOUT)
    return out[None]                                          # (1, COUT, LOUT)


def _reference(x, w, b):
    """Pure-JAX f32 reference: transposed conv via lhs-dilated conv + epilogue."""
    w_conv = jnp.transpose(jnp.flip(w, axis=2), (1, 0, 2))    # (COUT, CIN, K)
    v1 = lax.conv_general_dilated(
        x, w_conv,
        window_strides=(1,),
        padding=[(K - 1 - PAD, K - 1 - PAD)],
        lhs_dilation=(STRIDE,),
        dimension_numbers=("NCH", "OIH", "NCH"),
        precision=lax.Precision.HIGHEST,
    ) + b.reshape(1, COUT, 1)
    v4 = jnp.clip(v1 + 3.0, 0.0, 6.0)
    return v1 * v4 / 6.0


if __name__ == "__main__":
    key = jax.random.PRNGKey(0)
    kx, kw, kb = jax.random.split(key, 3)

    # Deterministic synthetic parameters (PyTorch-like uniform init range).
    bound = 1.0 / (CIN * K) ** 0.5
    x = jax.random.normal(kx, (1, CIN, LIN), jnp.float32)
    w = jax.random.uniform(kw, (CIN, COUT, K), jnp.float32, -bound, bound)
    b = jax.random.uniform(kb, (COUT,), jnp.float32, -bound, bound)

    w_stack, b_stack = prepare_params(w, b)          # one-time weight repack
    out = model_forward(x, w_stack, b_stack)
    jax.block_until_ready(out)

    ref = _reference(x, w, b)
    assert out.shape == (1, COUT, LOUT)
    # f32 end-to-end; tolerance only guards against matmul-pass ordering
    # differences between the MXU kernel and the XLA convolution reference.
    err = float(jnp.max(jnp.abs(out - ref)))
    assert jnp.allclose(out, ref, atol=5e-3, rtol=5e-3), f"max abs err {err}"

    print("KERNEL_OK")
</pallas_src>

<mosaic_0001>
module attributes {stable_mosaic.version = 11 : i64} {
  func.func @_convt_hardswishish_kernel(%arg0: memref<64x128xf32, #tpu.memory_space<vmem>>, %arg1: memref<6x64x64xf32, #tpu.memory_space<vmem>>, %arg2: memref<64x1xf32, #tpu.memory_space<vmem>>, %arg3: memref<64x128xf32, #tpu.memory_space<vmem>>) attributes {dimension_semantics = [], scalar_prefetch = 0 : i64, scratch_operands = 0 : i64, tpu.core_type = #tpu.core_type<tc>} {
    %c0 = arith.constant 0 : index
    %c0_0 = arith.constant 0 : index
    %0 = vector.load %arg0[%c0, %c0_0] : memref<64x128xf32, #tpu.memory_space<vmem>>, vector<64x128xf32>
    %cst = arith.constant 0.000000e+00 : f32
    %1 = vector.broadcast %cst : f32 to vector<64x128xf32>
    %c3_i32 = arith.constant 3 : i32
    %2 = tpu.dynamic_rotate %0 by %c3_i32 dim 1 : vector<64x128xf32>, i32 -> vector<64x128xf32>
    %c0_1 = arith.constant 0 : index
    %c0_2 = arith.constant 0 : index
    %c0_3 = arith.constant 0 : index
    %3 = vector.load %arg1[%c0_1, %c0_2, %c0_3] : memref<6x64x64xf32, #tpu.memory_space<vmem>>, vector<1x64x64xf32>
    %4 = vector.shape_cast %3 : vector<1x64x64xf32> to vector<64x64xf32>
    %cst_4 = arith.constant dense<0.000000e+00> : vector<64x128xf32>
    %5 = tpu.matmul %4, %2, %cst_4 {dimension_numbers = #tpu.dot_dimension_numbers<[1], [0], [0], [1], [0, 0, 1, 1], [], []>} : vector<64x64xf32>, vector<64x128xf32>, vector<64x128xf32> -> vector<64x128xf32>
    %6 = arith.addf %1, %5 : vector<64x128xf32>
    %c2_i32 = arith.constant 2 : i32
    %7 = tpu.dynamic_rotate %0 by %c2_i32 dim 1 : vector<64x128xf32>, i32 -> vector<64x128xf32>
    %c1 = arith.constant 1 : index
    %c0_5 = arith.constant 0 : index
    %c0_6 = arith.constant 0 : index
    %8 = vector.load %arg1[%c1, %c0_5, %c0_6] : memref<6x64x64xf32, #tpu.memory_space<vmem>>, vector<1x64x64xf32>
    %9 = vector.shape_cast %8 : vector<1x64x64xf32> to vector<64x64xf32>
    %cst_7 = arith.constant dense<0.000000e+00> : vector<64x128xf32>
    %10 = tpu.matmul %9, %7, %cst_7 {dimension_numbers = #tpu.dot_dimension_numbers<[1], [0], [0], [1], [0, 0, 1, 1], [], []>} : vector<64x64xf32>, vector<64x128xf32>, vector<64x128xf32> -> vector<64x128xf32>
    %11 = arith.addf %6, %10 : vector<64x128xf32>
    %c1_i32 = arith.constant 1 : i32
    %12 = tpu.dynamic_rotate %0 by %c1_i32 dim 1 : vector<64x128xf32>, i32 -> vector<64x128xf32>
    %c2 = arith.constant 2 : index
    %c0_8 = arith.constant 0 : index
    %c0_9 = arith.constant 0 : index
    %13 = vector.load %arg1[%c2, %c0_8, %c0_9] : memref<6x64x64xf32, #tpu.memory_space<vmem>>, vector<1x64x64xf32>
    %14 = vector.shape_cast %13 : vector<1x64x64xf32> to vector<64x64xf32>
    %cst_10 = arith.constant dense<0.000000e+00> : vector<64x128xf32>
    %15 = tpu.matmul %14, %12, %cst_10 {dimension_numbers = #tpu.dot_dimension_numbers<[1], [0], [0], [1], [0, 0, 1, 1], [], []>} : vector<64x64xf32>, vector<64x128xf32>, vector<64x128xf32> -> vector<64x128xf32>
    %16 = arith.addf %11, %15 : vector<64x128xf32>
    %c3 = arith.constant 3 : index
    %c0_11 = arith.constant 0 : index
    %c0_12 = arith.constant 0 : index
    %17 = vector.load %arg1[%c3, %c0_11, %c0_12] : memref<6x64x64xf32, #tpu.memory_space<vmem>>, vector<1x64x64xf32>
    %18 = vector.shape_cast %17 : vector<1x64x64xf32> to vector<64x64xf32>
    %cst_13 = arith.constant dense<0.000000e+00> : vector<64x128xf32>
    %19 = tpu.matmul %18, %0, %cst_13 {dimension_numbers = #tpu.dot_dimension_numbers<[1], [0], [0], [1], [0, 0, 1, 1], [], []>} : vector<64x64xf32>, vector<64x128xf32>, vector<64x128xf32> -> vector<64x128xf32>
    %20 = arith.addf %16, %19 : vector<64x128xf32>
    %c127_i32 = arith.constant 127 : i32
    %21 = tpu.dynamic_rotate %0 by %c127_i32 dim 1 : vector<64x128xf32>, i32 -> vector<64x128xf32>
    %c4 = arith.constant 4 : index
    %c0_14 = arith.constant 0 : index
    %c0_15 = arith.constant 0 : index
    %22 = vector.load %arg1[%c4, %c0_14, %c0_15] : memref<6x64x64xf32, #tpu.memory_space<vmem>>, vector<1x64x64xf32>
    %23 = vector.shape_cast %22 : vector<1x64x64xf32> to vector<64x64xf32>
    %cst_16 = arith.constant dense<0.000000e+00> : vector<64x128xf32>
    %24 = tpu.matmul %23, %21, %cst_16 {dimension_numbers = #tpu.dot_dimension_numbers<[1], [0], [0], [1], [0, 0, 1, 1], [], []>} : vector<64x64xf32>, vector<64x128xf32>, vector<64x128xf32> -> vector<64x128xf32>
    %25 = arith.addf %20, %24 : vector<64x128xf32>
    %c126_i32 = arith.constant 126 : i32
    %26 = tpu.dynamic_rotate %0 by %c126_i32 dim 1 : vector<64x128xf32>, i32 -> vector<64x128xf32>
    %c5 = arith.constant 5 : index
    %c0_17 = arith.constant 0 : index
    %c0_18 = arith.constant 0 : index
    %27 = vector.load %arg1[%c5, %c0_17, %c0_18] : memref<6x64x64xf32, #tpu.memory_space<vmem>>, vector<1x64x64xf32>
    %28 = vector.shape_cast %27 : vector<1x64x64xf32> to vector<64x64xf32>
    %cst_19 = arith.constant dense<0.000000e+00> : vector<64x128xf32>
    %29 = tpu.matmul %28, %26, %cst_19 {dimension_numbers = #tpu.dot_dimension_numbers<[1], [0], [0], [1], [0, 0, 1, 1], [], []>} : vector<64x64xf32>, vector<64x128xf32>, vector<64x128xf32> -> vector<64x128xf32>
    %30 = arith.addf %25, %29 : vector<64x128xf32>
    %c0_20 = arith.constant 0 : index
    %c0_21 = arith.constant 0 : index
    %31 = vector.load %arg2[%c0_20, %c0_21] : memref<64x1xf32, #tpu.memory_space<vmem>>, vector<64x1xf32>
    %32 = vector.broadcast %31 : vector<64x1xf32> to vector<64x128xf32>
    %33 = arith.addf %30, %32 : vector<64x128xf32>
    %cst_22 = arith.constant 3.000000e+00 : f32
    %34 = vector.broadcast %cst_22 : f32 to vector<64x128xf32>
    %35 = arith.addf %33, %34 : vector<64x128xf32>
    %cst_23 = arith.constant 0.000000e+00 : f32
    %cst_24 = arith.constant 6.000000e+00 : f32
    %36 = vector.broadcast %cst_23 : f32 to vector<64x128xf32>
    %37 = arith.maximumf %36, %35 : vector<64x128xf32>
    %38 = vector.broadcast %cst_24 : f32 to vector<64x128xf32>
    %39 = arith.minimumf %38, %37 : vector<64x128xf32>
    %40 = arith.mulf %33, %39 : vector<64x128xf32>
    %cst_25 = arith.constant 0.166666672 : f32
    %41 = vector.broadcast %cst_25 : f32 to vector<64x128xf32>
    %42 = arith.mulf %40, %41 : vector<64x128xf32>
    %c0_26 = arith.constant 0 : index
    %c0_27 = arith.constant 0 : index
    %43 = vector.load %arg3[%c0_26, %c0_27] : memref<64x128xf32, #tpu.memory_space<vmem>>, vector<64x128xf32>
    tpu.vector_store %arg3[%c0_26, %c0_27], %42 {strides = array<i32>} : memref<64x128xf32, #tpu.memory_space<vmem>>, vector<64x128xf32>,
    return
  }
}

</mosaic_0001>

<llo_original>
// kernel: model_forward.1
$region0: #{model_forward.1}
  #allocation0 [shape = 'u32[]', space=smem, size = 0x4, offset = 0x4, fixed_abs, tag = 'smem constant byte address 0x4 - core index']
  #allocation1 [shape = 'u32[144,128]{1,0:T(1,128)}', space=vmem, size = 0x12000, scoped, tag = 'internal scratch']
  %s0 = inlined_call_operand.vmem [shape: f32[64,128], index: 0, kind: input, shape index: {}]
  %s1 = inlined_call_operand.hbm [shape: f32[6,64,64], index: 1, kind: input, shape index: {}]
  %s2 = inlined_call_operand.vmem [shape: f32[64,1], index: 2, kind: input, shape index: {}]
  %s3 = inlined_call_operand.vmem [shape: f32[64,128], index: 3, kind: output, shape index: {}]
  %s4 = sld [smem:[#allocation0]]
  $region26: #{model_forward.1} parent=0
    _
  %s6 = ssub.s32 1, %s4
  %s7 = scalar_select 0, %s6, %s4
  $region1: #{model_forward.1} parent=0
    #allocation2 [shape = 'u8[196608]{0}', space=vmem, size = 0x30000, scoped, tag = 'input window, operand 1, single buffered']
    #allocation3 [shape = 's32[1]{0}', space=sflag, size = 0x4, scoped, tag = 'scoped memory for model_forward.1']
    %8 = vsyncpa [#allocation3], 0
    // Predicated region
    $region2: #{model_forward.1} parent=1 // pred_check
      _
    $region3: #{model_forward.1} parent=1 // pred_check_branch
      %10 = sbr.rel (0) target = $region5
    $region4: #{model_forward.1} parent=1 // pred_region
      _
    $region5: #{model_forward.1} parent=1 // pred_fallthru
      _
    // Predicated region
    $region6: #{model_forward.1} parent=1 // pred_check
      _
    $region7: #{model_forward.1} parent=1 // pred_check_branch
      %12 = sbr.rel (0) target = $region9
    $region8: #{model_forward.1} parent=1 // pred_region
      %s14 = ssub.s32 6144, 6144
      %15 = vsyncadd [#allocation3], %s14
      %s16 = sshll.u32 [#allocation2], 4
      %s17 = int_to_ptr.vmem [resolvable:$true] %s16
      %22 = dma.hbm_to_vmem [thread:$0]  %s1, 6144, %s17, [#allocation3], 128, 128, 8
    $region9: #{model_forward.1} parent=1 // pred_fallthru
      _
    // Predicated region
    $region10: #{model_forward.1} parent=1 // pred_check
      _
    $region11: #{model_forward.1} parent=1 // pred_check_branch
      %24 = sbr.rel (0) target = $region13
    $region12: #{model_forward.1} parent=1 // pred_region
      _
    $region13: #{model_forward.1} parent=1 // pred_fallthru
      _
    // Predicated region
    $region14: #{model_forward.1} parent=1 // pred_check
      _
    $region15: #{model_forward.1} parent=1 // pred_check_branch
      %26 = sbr.rel (0) target = $region17
    $region16: #{model_forward.1} parent=1 // pred_region
      %27 = dma.done [#allocation3], 6144
    $region17: #{model_forward.1} parent=1 // pred_fallthru
      _
    %v28 = vld [vmem:[%s0] sm:$0xff]
    %v29 = vld [vmem:[%s0 + $0x8] sm:$0xff]
    %v30 = vld [vmem:[%s0 + $0x10] sm:$0xff]
    %v31 = vld [vmem:[%s0 + $0x18] sm:$0xff]
    %v32 = vld [vmem:[%s0 + $0x20] sm:$0xff]
    %v33 = vld [vmem:[%s0 + $0x28] sm:$0xff]
    %v34 = vld [vmem:[%s0 + $0x30] sm:$0xff]
    %v35 = vld [vmem:[%s0 + $0x38] sm:$0xff]
    %36 = vrot.lane.b32.xlu0 %v28, 3
    %v37 = vpop.permute.xlu0 %36
    %38 = vrot.lane.b32.xlu0 %v29, 3
    %v39 = vpop.permute.xlu0 %38
    %40 = vrot.lane.b32.xlu0 %v30, 3
    %v41 = vpop.permute.xlu0 %40
    %42 = vrot.lane.b32.xlu0 %v31, 3
    %v43 = vpop.permute.xlu0 %42
    %44 = vrot.lane.b32.xlu0 %v32, 3
    %v45 = vpop.permute.xlu0 %44
    %46 = vrot.lane.b32.xlu0 %v33, 3
    %v47 = vpop.permute.xlu0 %46
    %48 = vrot.lane.b32.xlu0 %v34, 3
    %v49 = vpop.permute.xlu0 %48
    %50 = vrot.lane.b32.xlu0 %v35, 3
    %v51 = vpop.permute.xlu0 %50
    %v52 = vld [vmem:[#allocation2] sm:$0xff]
    %v53 = vld [vmem:[#allocation2 + $0x8] sm:$0xff]
    %v54 = vld [vmem:[#allocation2 + $0x10] sm:$0xff]
    %v55 = vld [vmem:[#allocation2 + $0x18] sm:$0xff]
    %v56 = vld [vmem:[#allocation2 + $0x20] sm:$0xff]
    %v57 = vld [vmem:[#allocation2 + $0x28] sm:$0xff]
    %v58 = vld [vmem:[#allocation2 + $0x30] sm:$0xff]
    %v59 = vld [vmem:[#allocation2 + $0x38] sm:$0xff]
    %60 = vrot.lane.b32.xlu0 %v28, 2
    %v61 = vpop.permute.xlu0 %60
    %62 = vrot.lane.b32.xlu0 %v29, 2
    %v63 = vpop.permute.xlu0 %62
    %64 = vrot.lane.b32.xlu0 %v30, 2
    %v65 = vpop.permute.xlu0 %64
    %66 = vrot.lane.b32.xlu0 %v31, 2
    %v67 = vpop.permute.xlu0 %66
    %68 = vrot.lane.b32.xlu0 %v32, 2
    %v69 = vpop.permute.xlu0 %68
    %70 = vrot.lane.b32.xlu0 %v33, 2
    %v71 = vpop.permute.xlu0 %70
    %72 = vrot.lane.b32.xlu0 %v34, 2
    %v73 = vpop.permute.xlu0 %72
    %74 = vrot.lane.b32.xlu0 %v35, 2
    %v75 = vpop.permute.xlu0 %74
    %s76 = scalar_lea.vmem [#allocation2], 64
    %v77 = vld [vmem:[%s76] sm:$0xff]
    %v78 = vld [vmem:[%s76 + $0x8] sm:$0xff]
    %v79 = vld [vmem:[%s76 + $0x10] sm:$0xff]
    %v80 = vld [vmem:[%s76 + $0x18] sm:$0xff]
    %v81 = vld [vmem:[%s76 + $0x20] sm:$0xff]
    %v82 = vld [vmem:[%s76 + $0x28] sm:$0xff]
    %v83 = vld [vmem:[%s76 + $0x30] sm:$0xff]
    %v84 = vld [vmem:[%s76 + $0x38] sm:$0xff]
    %vm85 = vcmask 523264
    %v87 = vsel %vm85, %v77, 0
    %v90 = vsel %vm85, %v78, 0
    %v93 = vsel %vm85, %v79, 0
    %v96 = vsel %vm85, %v80, 0
    %v99 = vsel %vm85, %v81, 0
    %v102 = vsel %vm85, %v82, 0
    %v105 = vsel %vm85, %v83, 0
    %v108 = vsel %vm85, %v84, 0
    %110 = vmatprep.subr.mxu0 0.0
    %111 = vmatpush1.msra.mxu0 %v61
    %112 = vmatprep.subr.mxu0 0.0
    %113 = vmatpush1.msra.mxu0 %v63
    %114 = vmatprep.subr.mxu0 0.0
    %115 = vmatpush1.msra.mxu0 %v65
    %116 = vmatprep.subr.mxu0 0.0
    %117 = vmatpush1.msra.mxu0 %v67
    %118 = vmatprep.subr.mxu0 0.0
    %119 = vmatpush1.msra.mxu0 %v69
    %120 = vmatprep.subr.mxu0 0.0
    %121 = vmatpush1.msra.mxu0 %v71
    %122 = vmatprep.subr.mxu0 0.0
    %123 = vmatpush1.msra.mxu0 %v73
    %124 = vmatprep.subr.mxu0 0.0
    %125 = vmatpush1.msra.mxu0 %v75
    %126 = vmatprep.subr.mxu0 0.0
    %127 = vmatpush1.msra.mxu0 0.0
    %128 = vmatprep.subr.mxu0 0.0
    %129 = vmatpush1.msra.mxu0 0.0
    %130 = vmatprep.subr.mxu0 0.0
    %131 = vmatpush1.msra.mxu0 0.0
    %132 = vmatprep.subr.mxu0 0.0
    %133 = vmatpush1.msra.mxu0 0.0
    %134 = vmatprep.subr.mxu0 0.0
    %135 = vmatpush1.msra.mxu0 0.0
    %136 = vmatprep.subr.mxu0 0.0
    %137 = vmatpush1.msra.mxu0 0.0
    %138 = vmatprep.subr.mxu0 0.0
    %139 = vmatpush1.msra.mxu0 0.0
    %140 = vmatprep.subr.mxu0 0.0
    %141 = vmatpush1.msra.mxu0 0.0
    %142 = vmatprep.subr.mxu0 0.0
    %143 = vmatpush1.msra.mxu0 0.0
    %144 = vmatprep.subr.mxu0 0.0
    %145 = vmatpush1.msra.mxu0 0.0
    %146 = vmatprep.subr.mxu0 0.0
    %147 = vmatpush1.msra.mxu0 0.0
    %148 = vmatprep.subr.mxu0 0.0
    %149 = vmatpush1.msra.mxu0 0.0
    %150 = vmatprep.subr.mxu0 0.0
    %151 = vmatpush1.msra.mxu0 0.0
    %152 = vmatprep.subr.mxu0 0.0
    %153 = vmatpush1.msra.mxu0 0.0
    %154 = vmatprep.subr.mxu0 0.0
    %155 = vmatpush1.msra.mxu0 0.0
    %156 = vmatprep.subr.mxu0 0.0
    %157 = vmatpush1.msra.mxu0 0.0
    %158 = vmatprep.subr.mxu0 0.0
    %159 = vmatpush1.msra.mxu0 0.0
    %160 = vmatprep.subr.mxu0 0.0
    %161 = vmatpush1.msra.mxu0 0.0
    %162 = vmatprep.subr.mxu0 0.0
    %163 = vmatpush1.msra.mxu0 0.0
    %164 = vmatprep.subr.mxu0 0.0
    %165 = vmatpush1.msra.mxu0 0.0
    %166 = vmatprep.subr.mxu0 0.0
    %167 = vmatpush1.msra.mxu0 0.0
    %168 = vmatprep.subr.mxu0 0.0
    %169 = vmatpush1.msra.mxu0 0.0
    %170 = vmatprep.subr.mxu0 0.0
    %171 = vmatpush1.msra.mxu0 0.0
    %172 = vmatprep.subr.mxu0 0.0
    %173 = vmatpush1.msra.mxu0 0.0
    %174 = vmatprep.mubr.f32.mxu0 0.0
    %175 = vmatmul.mubr.f32.gmra.mrb[0].mxu0 %v87
    %v176 = vpop.f32.mrb[0].mxu0
    %v177 = vadd.f32 0.0, %v176
    %v178 = vpop.f32.mrb[0].mxu0
    %179 = vmatprep.mubr.f32.mxu0 0.0
    %180 = vmatmul.mubr.f32.gmra.mrb[0].mxu0 %v90
    %v181 = vpop.f32.mrb[0].mxu0
    %v182 = vadd.f32 0.0, %v181
    %v183 = vpop.f32.mrb[0].mxu0
    %184 = vmatprep.mubr.f32.mxu0 0.0
    %185 = vmatmul.mubr.f32.gmra.mrb[0].mxu0 %v93
    %v186 = vpop.f32.mrb[0].mxu0
    %v187 = vadd.f32 0.0, %v186
    %v188 = vpop.f32.mrb[0].mxu0
    %189 = vmatprep.mubr.f32.mxu0 0.0
    %190 = vmatmul.mubr.f32.gmra.mrb[0].mxu0 %v96
    %v191 = vpop.f32.mrb[0].mxu0
    %v192 = vadd.f32 0.0, %v191
    %v193 = vpop.f32.mrb[0].mxu0
    %194 = vmatprep.mubr.f32.mxu0 0.0
    %195 = vmatmul.mubr.f32.gmra.mrb[0].mxu0 %v99
    %v196 = vpop.f32.mrb[0].mxu0
    %v197 = vadd.f32 0.0, %v196
    %v198 = vpop.f32.mrb[0].mxu0
    %199 = vmatprep.mubr.f32.mxu0 0.0
    %200 = vmatmul.mubr.f32.gmra.mrb[0].mxu0 %v102
    %v201 = vpop.f32.mrb[0].mxu0
    %v202 = vadd.f32 0.0, %v201
    %v203 = vpop.f32.mrb[0].mxu0
    %204 = vmatprep.mubr.f32.mxu0 0.0
    %205 = vmatmul.mubr.f32.gmra.mrb[0].mxu0 %v105
    %v206 = vpop.f32.mrb[0].mxu0
    %v207 = vadd.f32 0.0, %v206
    %v208 = vpop.f32.mrb[0].mxu0
    %209 = vmatprep.mubr.f32.mxu0 0.0
    %210 = vmatmul.mubr.f32.gmra.mrb[0].mxu0 %v108
    %v211 = vpop.f32.mrb[0].mxu0
    %v212 = vadd.f32 0.0, %v211
    %v213 = vpop.f32.mrb[0].mxu0
    %214 = vdwg.mxu0
    %v216 = vsel %vm85, %v52, 0
    %v219 = vsel %vm85, %v53, 0
    %v222 = vsel %vm85, %v54, 0
    %v225 = vsel %vm85, %v55, 0
    %v228 = vsel %vm85, %v56, 0
    %v231 = vsel %vm85, %v57, 0
    %v234 = vsel %vm85, %v58, 0
    %v237 = vsel %vm85, %v59, 0
    %239 = vmatprep.subr.mxu0 0.0
    %240 = vmatpush1.msra.mxu0 %v37
    %241 = vmatprep.subr.mxu0 0.0
    %242 = vmatpush1.msra.mxu0 %v39
    %243 = vmatprep.subr.mxu0 0.0
    %244 = vmatpush1.msra.mxu0 %v41
    %245 = vmatprep.subr.mxu0 0.0
    %246 = vmatpush1.msra.mxu0 %v43
    %247 = vmatprep.subr.mxu0 0.0
    %248 = vmatpush1.msra.mxu0 %v45
    %249 = vmatprep.subr.mxu0 0.0
    %250 = vmatpush1.msra.mxu0 %v47
    %251 = vmatprep.subr.mxu0 0.0
    %252 = vmatpush1.msra.mxu0 %v49
    %253 = vmatprep.subr.mxu0 0.0
    %254 = vmatpush1.msra.mxu0 %v51
    %255 = vmatprep.subr.mxu0 0.0
    %256 = vmatpush1.msra.mxu0 0.0
    %257 = vmatprep.subr.mxu0 0.0
    %258 = vmatpush1.msra.mxu0 0.0
    %259 = vmatprep.subr.mxu0 0.0
    %260 = vmatpush1.msra.mxu0 0.0
    %261 = vmatprep.subr.mxu0 0.0
    %262 = vmatpush1.msra.mxu0 0.0
    %263 = vmatprep.subr.mxu0 0.0
    %264 = vmatpush1.msra.mxu0 0.0
    %265 = vmatprep.subr.mxu0 0.0
    %266 = vmatpush1.msra.mxu0 0.0
    %267 = vmatprep.subr.mxu0 0.0
    %268 = vmatpush1.msra.mxu0 0.0
    %269 = vmatprep.subr.mxu0 0.0
    %270 = vmatpush1.msra.mxu0 0.0
    %271 = vmatprep.subr.mxu0 0.0
    %272 = vmatpush1.msra.mxu0 0.0
    %273 = vmatprep.subr.mxu0 0.0
    %274 = vmatpush1.msra.mxu0 0.0
    %275 = vmatprep.subr.mxu0 0.0
    %276 = vmatpush1.msra.mxu0 0.0
    %277 = vmatprep.subr.mxu0 0.0
    %278 = vmatpush1.msra.mxu0 0.0
    %279 = vmatprep.subr.mxu0 0.0
    %280 = vmatpush1.msra.mxu0 0.0
    %281 = vmatprep.subr.mxu0 0.0
    %282 = vmatpush1.msra.mxu0 0.0
    %283 = vmatprep.subr.mxu0 0.0
    %284 = vmatpush1.msra.mxu0 0.0
    %285 = vmatprep.subr.mxu0 0.0
    %286 = vmatpush1.msra.mxu0 0.0
    %287 = vmatprep.subr.mxu0 0.0
    %288 = vmatpush1.msra.mxu0 0.0
    %289 = vmatprep.subr.mxu0 0.0
    %290 = vmatpush1.msra.mxu0 0.0
    %291 = vmatprep.subr.mxu0 0.0
    %292 = vmatpush1.msra.mxu0 0.0
    %293 = vmatprep.subr.mxu0 0.0
    %294 = vmatpush1.msra.mxu0 0.0
    %295 = vmatprep.subr.mxu0 0.0
    %296 = vmatpush1.msra.mxu0 0.0
    %297 = vmatprep.subr.mxu0 0.0
    %298 = vmatpush1.msra.mxu0 0.0
    %299 = vmatprep.subr.mxu0 0.0
    %300 = vmatpush1.msra.mxu0 0.0
    %301 = vmatprep.subr.mxu0 0.0
    %302 = vmatpush1.msra.mxu0 0.0
    %303 = vmatprep.mubr.f32.mxu0 0.0
    %304 = vmatmul.mubr.f32.gmra.mrb[0].mxu0 %v216
    %v305 = vpop.f32.mrb[0].mxu0
    %v306 = vadd.f32 %v177, %v305
    %v307 = vpop.f32.mrb[0].mxu0
    %308 = vmatprep.mubr.f32.mxu0 0.0
    %309 = vmatmul.mubr.f32.gmra.mrb[0].mxu0 %v219
    %v310 = vpop.f32.mrb[0].mxu0
    %v311 = vadd.f32 %v182, %v310
    %v312 = vpop.f32.mrb[0].mxu0
    %313 = vmatprep.mubr.f32.mxu0 0.0
    %314 = vmatmul.mubr.f32.gmra.mrb[0].mxu0 %v222
    %v315 = vpop.f32.mrb[0].mxu0
    %v316 = vadd.f32 %v187, %v315
    %v317 = vpop.f32.mrb[0].mxu0
    %318 = vmatprep.mubr.f32.mxu0 0.0
    %319 = vmatmul.mubr.f32.gmra.mrb[0].mxu0 %v225
    %v320 = vpop.f32.mrb[0].mxu0
    %v321 = vadd.f32 %v192, %v320
    %v322 = vpop.f32.mrb[0].mxu0
    %323 = vmatprep.mubr.f32.mxu0 0.0
    %324 = vmatmul.mubr.f32.gmra.mrb[0].mxu0 %v228
    %v325 = vpop.f32.mrb[0].mxu0
    %v326 = vadd.f32 %v197, %v325
    %v327 = vpop.f32.mrb[0].mxu0
    %328 = vmatprep.mubr.f32.mxu0 0.0
    %329 = vmatmul.mubr.f32.gmra.mrb[0].mxu0 %v231
    %v330 = vpop.f32.mrb[0].mxu0
    %v331 = vadd.f32 %v202, %v330
    %v332 = vpop.f32.mrb[0].mxu0
    %333 = vmatprep.mubr.f32.mxu0 0.0
    %334 = vmatmul.mubr.f32.gmra.mrb[0].mxu0 %v234
    %v335 = vpop.f32.mrb[0].mxu0
    %v336 = vadd.f32 %v207, %v335
    %v337 = vpop.f32.mrb[0].mxu0
    %338 = vmatprep.mubr.f32.mxu0 0.0
    %339 = vmatmul.mubr.f32.gmra.mrb[0].mxu0 %v237
    %v340 = vpop.f32.mrb[0].mxu0
    %v341 = vadd.f32 %v212, %v340
    %v342 = vpop.f32.mrb[0].mxu0
    %343 = vdwg.mxu0
    %344 = vrot.lane.b32.xlu0 %v28, 1
    %v345 = vpop.permute.xlu0 %344
    %346 = vrot.lane.b32.xlu0 %v29, 1
    %v347 = vpop.permute.xlu0 %346
    %348 = vrot.lane.b32.xlu0 %v30, 1
    %v349 = vpop.permute.xlu0 %348
    %350 = vrot.lane.b32.xlu0 %v31, 1
    %v351 = vpop.permute.xlu0 %350
    %352 = vrot.lane.b32.xlu0 %v32, 1
    %v353 = vpop.permute.xlu0 %352
    %354 = vrot.lane.b32.xlu0 %v33, 1
    %v355 = vpop.permute.xlu0 %354
    %356 = vrot.lane.b32.xlu0 %v34, 1
    %v357 = vpop.permute.xlu0 %356
    %358 = vrot.lane.b32.xlu0 %v35, 1
    %v359 = vpop.permute.xlu0 %358
    %s360 = scalar_lea.vmem [#allocation2], 128
    %v361 = vld [vmem:[%s360] sm:$0xff]
    %v362 = vld [vmem:[%s360 + $0x8] sm:$0xff]
    %v363 = vld [vmem:[%s360 + $0x10] sm:$0xff]
    %v364 = vld [vmem:[%s360 + $0x18] sm:$0xff]
    %v365 = vld [vmem:[%s360 + $0x20] sm:$0xff]
    %v366 = vld [vmem:[%s360 + $0x28] sm:$0xff]
    %v367 = vld [vmem:[%s360 + $0x30] sm:$0xff]
    %v368 = vld [vmem:[%s360 + $0x38] sm:$0xff]
    %v370 = vsel %vm85, %v361, 0
    %v373 = vsel %vm85, %v362, 0
    %v376 = vsel %vm85, %v363, 0
    %v379 = vsel %vm85, %v364, 0
    %v382 = vsel %vm85, %v365, 0
    %v385 = vsel %vm85, %v366, 0
    %v388 = vsel %vm85, %v367, 0
    %v391 = vsel %vm85, %v368, 0
    %393 = vmatprep.subr.mxu0 0.0
    %394 = vmatpush1.msra.mxu0 %v345
    %395 = vmatprep.subr.mxu0 0.0
    %396 = vmatpush1.msra.mxu0 %v347
    %397 = vmatprep.subr.mxu0 0.0
    %398 = vmatpush1.msra.mxu0 %v349
    %399 = vmatprep.subr.mxu0 0.0
    %400 = vmatpush1.msra.mxu0 %v351
    %401 = vmatprep.subr.mxu0 0.0
    %402 = vmatpush1.msra.mxu0 %v353
    %403 = vmatprep.subr.mxu0 0.0
    %404 = vmatpush1.msra.mxu0 %v355
    %405 = vmatprep.subr.mxu0 0.0
    %406 = vmatpush1.msra.mxu0 %v357
    %407 = vmatprep.subr.mxu0 0.0
    %408 = vmatpush1.msra.mxu0 %v359
    %409 = vmatprep.subr.mxu0 0.0
    %410 = vmatpush1.msra.mxu0 0.0
    %411 = vmatprep.subr.mxu0 0.0
    %412 = vmatpush1.msra.mxu0 0.0
    %413 = vmatprep.subr.mxu0 0.0
    %414 = vmatpush1.msra.mxu0 0.0
    %415 = vmatprep.subr.mxu0 0.0
    %416 = vmatpush1.msra.mxu0 0.0
    %417 = vmatprep.subr.mxu0 0.0
    %418 = vmatpush1.msra.mxu0 0.0
    %419 = vmatprep.subr.mxu0 0.0
    %420 = vmatpush1.msra.mxu0 0.0
    %421 = vmatprep.subr.mxu0 0.0
    %422 = vmatpush1.msra.mxu0 0.0
    %423 = vmatprep.subr.mxu0 0.0
    %424 = vmatpush1.msra.mxu0 0.0
    %425 = vmatprep.subr.mxu0 0.0
    %426 = vmatpush1.msra.mxu0 0.0
    %427 = vmatprep.subr.mxu0 0.0
    %428 = vmatpush1.msra.mxu0 0.0
    %429 = vmatprep.subr.mxu0 0.0
    %430 = vmatpush1.msra.mxu0 0.0
    %431 = vmatprep.subr.mxu0 0.0
    %432 = vmatpush1.msra.mxu0 0.0
    %433 = vmatprep.subr.mxu0 0.0
    %434 = vmatpush1.msra.mxu0 0.0
    %435 = vmatprep.subr.mxu0 0.0
    %436 = vmatpush1.msra.mxu0 0.0
    %437 = vmatprep.subr.mxu0 0.0
    %438 = vmatpush1.msra.mxu0 0.0
    %439 = vmatprep.subr.mxu0 0.0
    %440 = vmatpush1.msra.mxu0 0.0
    %441 = vmatprep.subr.mxu0 0.0
    %442 = vmatpush1.msra.mxu0 0.0
    %443 = vmatprep.subr.mxu0 0.0
    %444 = vmatpush1.msra.mxu0 0.0
    %445 = vmatprep.subr.mxu0 0.0
    %446 = vmatpush1.msra.mxu0 0.0
    %447 = vmatprep.subr.mxu0 0.0
    %448 = vmatpush1.msra.mxu0 0.0
    %449 = vmatprep.subr.mxu0 0.0
    %450 = vmatpush1.msra.mxu0 0.0
    %451 = vmatprep.subr.mxu0 0.0
    %452 = vmatpush1.msra.mxu0 0.0
    %453 = vmatprep.subr.mxu0 0.0
    %454 = vmatpush1.msra.mxu0 0.0
    %455 = vmatprep.subr.mxu0 0.0
    %456 = vmatpush1.msra.mxu0 0.0
    %457 = vmatprep.mubr.f32.mxu0 0.0
    %458 = vmatmul.mubr.f32.gmra.mrb[0].mxu0 %v370
    %v459 = vpop.f32.mrb[0].mxu0
    %v460 = vadd.f32 0.0, %v459
    %v461 = vpop.f32.mrb[0].mxu0
    %462 = vmatprep.mubr.f32.mxu0 0.0
    %463 = vmatmul.mubr.f32.gmra.mrb[0].mxu0 %v373
    %v464 = vpop.f32.mrb[0].mxu0
    %v465 = vadd.f32 0.0, %v464
    %v466 = vpop.f32.mrb[0].mxu0
    %467 = vmatprep.mubr.f32.mxu0 0.0
    %468 = vmatmul.mubr.f32.gmra.mrb[0].mxu0 %v376
    %v469 = vpop.f32.mrb[0].mxu0
    %v470 = vadd.f32 0.0, %v469
    %v471 = vpop.f32.mrb[0].mxu0
    %472 = vmatprep.mubr.f32.mxu0 0.0
    %473 = vmatmul.mubr.f32.gmra.mrb[0].mxu0 %v379
    %v474 = vpop.f32.mrb[0].mxu0
    %v475 = vadd.f32 0.0, %v474
    %v476 = vpop.f32.mrb[0].mxu0
    %477 = vmatprep.mubr.f32.mxu0 0.0
    %478 = vmatmul.mubr.f32.gmra.mrb[0].mxu0 %v382
    %v479 = vpop.f32.mrb[0].mxu0
    %v480 = vadd.f32 0.0, %v479
    %v481 = vpop.f32.mrb[0].mxu0
    %482 = vmatprep.mubr.f32.mxu0 0.0
    %483 = vmatmul.mubr.f32.gmra.mrb[0].mxu0 %v385
    %v484 = vpop.f32.mrb[0].mxu0
    %v485 = vadd.f32 0.0, %v484
    %v486 = vpop.f32.mrb[0].mxu0
    %487 = vmatprep.mubr.f32.mxu0 0.0
    %488 = vmatmul.mubr.f32.gmra.mrb[0].mxu0 %v388
    %v489 = vpop.f32.mrb[0].mxu0
    %v490 = vadd.f32 0.0, %v489
    %v491 = vpop.f32.mrb[0].mxu0
    %492 = vmatprep.mubr.f32.mxu0 0.0
    %493 = vmatmul.mubr.f32.gmra.mrb[0].mxu0 %v391
    %v494 = vpop.f32.mrb[0].mxu0
    %v495 = vadd.f32 0.0, %v494
    %v496 = vpop.f32.mrb[0].mxu0
    %497 = vdwg.mxu0
    %v498 = vadd.f32 %v306, %v460
    %v499 = vadd.f32 %v311, %v465
    %v500 = vadd.f32 %v316, %v470
    %v501 = vadd.f32 %v321, %v475
    %v502 = vadd.f32 %v326, %v480
    %v503 = vadd.f32 %v331, %v485
    %v504 = vadd.f32 %v336, %v490
    %v505 = vadd.f32 %v341, %v495
    %s506 = scalar_lea.vmem [#allocation2], 192
    %v507 = vld [vmem:[%s506] sm:$0xff]
    %v508 = vld [vmem:[%s506 + $0x8] sm:$0xff]
    %v509 = vld [vmem:[%s506 + $0x10] sm:$0xff]
    %v510 = vld [vmem:[%s506 + $0x18] sm:$0xff]
    %v511 = vld [vmem:[%s506 + $0x20] sm:$0xff]
    %v512 = vld [vmem:[%s506 + $0x28] sm:$0xff]
    %v513 = vld [vmem:[%s506 + $0x30] sm:$0xff]
    %v514 = vld [vmem:[%s506 + $0x38] sm:$0xff]
    %v516 = vsel %vm85, %v507, 0
    %v519 = vsel %vm85, %v508, 0
    %v522 = vsel %vm85, %v509, 0
    %v525 = vsel %vm85, %v510, 0
    %v528 = vsel %vm85, %v511, 0
    %v531 = vsel %vm85, %v512, 0
    %v534 = vsel %vm85, %v513, 0
    %v537 = vsel %vm85, %v514, 0
    %539 = vmatprep.subr.mxu0 0.0
    %540 = vmatpush1.msra.mxu0 %v28
    %541 = vmatprep.subr.mxu0 0.0
    %542 = vmatpush1.msra.mxu0 %v29
    %543 = vmatprep.subr.mxu0 0.0
    %544 = vmatpush1.msra.mxu0 %v30
    %545 = vmatprep.subr.mxu0 0.0
    %546 = vmatpush1.msra.mxu0 %v31
    %547 = vmatprep.subr.mxu0 0.0
    %548 = vmatpush1.msra.mxu0 %v32
    %549 = vmatprep.subr.mxu0 0.0
    %550 = vmatpush1.msra.mxu0 %v33
    %551 = vmatprep.subr.mxu0 0.0
    %552 = vmatpush1.msra.mxu0 %v34
    %553 = vmatprep.subr.mxu0 0.0
    %554 = vmatpush1.msra.mxu0 %v35
    %555 = vmatprep.subr.mxu0 0.0
    %556 = vmatpush1.msra.mxu0 0.0
    %557 = vmatprep.subr.mxu0 0.0
    %558 = vmatpush1.msra.mxu0 0.0
    %559 = vmatprep.subr.mxu0 0.0
    %560 = vmatpush1.msra.mxu0 0.0
    %561 = vmatprep.subr.mxu0 0.0
    %562 = vmatpush1.msra.mxu0 0.0
    %563 = vmatprep.subr.mxu0 0.0
    %564 = vmatpush1.msra.mxu0 0.0
    %565 = vmatprep.subr.mxu0 0.0
    %566 = vmatpush1.msra.mxu0 0.0
    %567 = vmatprep.subr.mxu0 0.0
    %568 = vmatpush1.msra.mxu0 0.0
    %569 = vmatprep.subr.mxu0 0.0
    %570 = vmatpush1.msra.mxu0 0.0
    %571 = vmatprep.subr.mxu0 0.0
    %572 = vmatpush1.msra.mxu0 0.0
    %573 = vmatprep.subr.mxu0 0.0
    %574 = vmatpush1.msra.mxu0 0.0
    %575 = vmatprep.subr.mxu0 0.0
    %576 = vmatpush1.msra.mxu0 0.0
    %577 = vmatprep.subr.mxu0 0.0
    %578 = vmatpush1.msra.mxu0 0.0
    %579 = vmatprep.subr.mxu0 0.0
    %580 = vmatpush1.msra.mxu0 0.0
    %581 = vmatprep.subr.mxu0 0.0
    %582 = vmatpush1.msra.mxu0 0.0
    %583 = vmatprep.subr.mxu0 0.0
    %584 = vmatpush1.msra.mxu0 0.0
    %585 = vmatprep.subr.mxu0 0.0
    %586 = vmatpush1.msra.mxu0 0.0
    %587 = vmatprep.subr.mxu0 0.0
    %588 = vmatpush1.msra.mxu0 0.0
    %589 = vmatprep.subr.mxu0 0.0
    %590 = vmatpush1.msra.mxu0 0.0
    %591 = vmatprep.subr.mxu0 0.0
    %592 = vmatpush1.msra.mxu0 0.0
    %593 = vmatprep.subr.mxu0 0.0
    %594 = vmatpush1.msra.mxu0 0.0
    %595 = vmatprep.subr.mxu0 0.0
    %596 = vmatpush1.msra.mxu0 0.0
    %597 = vmatprep.subr.mxu0 0.0
    %598 = vmatpush1.msra.mxu0 0.0
    %599 = vmatprep.subr.mxu0 0.0
    %600 = vmatpush1.msra.mxu0 0.0
    %601 = vmatprep.subr.mxu0 0.0
    %602 = vmatpush1.msra.mxu0 0.0
    %603 = vmatprep.mubr.f32.mxu0 0.0
    %604 = vmatmul.mubr.f32.gmra.mrb[0].mxu0 %v516
    %v605 = vpop.f32.mrb[0].mxu0
    %v606 = vadd.f32 0.0, %v605
    %v607 = vpop.f32.mrb[0].mxu0
    %608 = vmatprep.mubr.f32.mxu0 0.0
    %609 = vmatmul.mubr.f32.gmra.mrb[0].mxu0 %v519
    %v610 = vpop.f32.mrb[0].mxu0
    %v611 = vadd.f32 0.0, %v610
    %v612 = vpop.f32.mrb[0].mxu0
    %613 = vmatprep.mubr.f32.mxu0 0.0
    %614 = vmatmul.mubr.f32.gmra.mrb[0].mxu0 %v522
    %v615 = vpop.f32.mrb[0].mxu0
    %v616 = vadd.f32 0.0, %v615
    %v617 = vpop.f32.mrb[0].mxu0
    %618 = vmatprep.mubr.f32.mxu0 0.0
    %619 = vmatmul.mubr.f32.gmra.mrb[0].mxu0 %v525
    %v620 = vpop.f32.mrb[0].mxu0
    %v621 = vadd.f32 0.0, %v620
    %v622 = vpop.f32.mrb[0].mxu0
    %623 = vmatprep.mubr.f32.mxu0 0.0
    %624 = vmatmul.mubr.f32.gmra.mrb[0].mxu0 %v528
    %v625 = vpop.f32.mrb[0].mxu0
    %v626 = vadd.f32 0.0, %v625
    %v627 = vpop.f32.mrb[0].mxu0
    %628 = vmatprep.mubr.f32.mxu0 0.0
    %629 = vmatmul.mubr.f32.gmra.mrb[0].mxu0 %v531
    %v630 = vpop.f32.mrb[0].mxu0
    %v631 = vadd.f32 0.0, %v630
    %v632 = vpop.f32.mrb[0].mxu0
    %633 = vmatprep.mubr.f32.mxu0 0.0
    %634 = vmatmul.mubr.f32.gmra.mrb[0].mxu0 %v534
    %v635 = vpop.f32.mrb[0].mxu0
    %v636 = vadd.f32 0.0, %v635
    %v637 = vpop.f32.mrb[0].mxu0
    %638 = vmatprep.mubr.f32.mxu0 0.0
    %639 = vmatmul.mubr.f32.gmra.mrb[0].mxu0 %v537
    %v640 = vpop.f32.mrb[0].mxu0
    %v641 = vadd.f32 0.0, %v640
    %v642 = vpop.f32.mrb[0].mxu0
    %643 = vdwg.mxu0
    %v644 = vadd.f32 %v498, %v606
    %v645 = vadd.f32 %v499, %v611
    %v646 = vadd.f32 %v500, %v616
    %v647 = vadd.f32 %v501, %v621
    %v648 = vadd.f32 %v502, %v626
    %v649 = vadd.f32 %v503, %v631
    %v650 = vadd.f32 %v504, %v636
    %v651 = vadd.f32 %v505, %v641
    %652 = vrot.lane.b32.xlu0 %v28, 127
    %v653 = vpop.permute.xlu0 %652
    %654 = vrot.lane.b32.xlu0 %v29, 127
    %v655 = vpop.permute.xlu0 %654
    %656 = vrot.lane.b32.xlu0 %v30, 127
    %v657 = vpop.permute.xlu0 %656
    %658 = vrot.lane.b32.xlu0 %v31, 127
    %v659 = vpop.permute.xlu0 %658
    %660 = vrot.lane.b32.xlu0 %v32, 127
    %v661 = vpop.permute.xlu0 %660
    %662 = vrot.lane.b32.xlu0 %v33, 127
    %v663 = vpop.permute.xlu0 %662
    %664 = vrot.lane.b32.xlu0 %v34, 127
    %v665 = vpop.permute.xlu0 %664
    %666 = vrot.lane.b32.xlu0 %v35, 127
    %v667 = vpop.permute.xlu0 %666
    %s668 = scalar_lea.vmem [#allocation2], 256
    %v669 = vld [vmem:[%s668] sm:$0xff]
    %v670 = vld [vmem:[%s668 + $0x8] sm:$0xff]
    %v671 = vld [vmem:[%s668 + $0x10] sm:$0xff]
    %v672 = vld [vmem:[%s668 + $0x18] sm:$0xff]
    %v673 = vld [vmem:[%s668 + $0x20] sm:$0xff]
    %v674 = vld [vmem:[%s668 + $0x28] sm:$0xff]
    %v675 = vld [vmem:[%s668 + $0x30] sm:$0xff]
    %v676 = vld [vmem:[%s668 + $0x38] sm:$0xff]
    %v678 = vsel %vm85, %v669, 0
    %v681 = vsel %vm85, %v670, 0
    %v684 = vsel %vm85, %v671, 0
    %v687 = vsel %vm85, %v672, 0
    %v690 = vsel %vm85, %v673, 0
    %v693 = vsel %vm85, %v674, 0
    %v696 = vsel %vm85, %v675, 0
    %v699 = vsel %vm85, %v676, 0
    %701 = vmatprep.subr.mxu0 0.0
    %702 = vmatpush1.msra.mxu0 %v653
    %703 = vmatprep.subr.mxu0 0.0
    %704 = vmatpush1.msra.mxu0 %v655
    %705 = vmatprep.subr.mxu0 0.0
    %706 = vmatpush1.msra.mxu0 %v657
    %707 = vmatprep.subr.mxu0 0.0
    %708 = vmatpush1.msra.mxu0 %v659
    %709 = vmatprep.subr.mxu0 0.0
    %710 = vmatpush1.msra.mxu0 %v661
    %711 = vmatprep.subr.mxu0 0.0
    %712 = vmatpush1.msra.mxu0 %v663
    %713 = vmatprep.subr.mxu0 0.0
    %714 = vmatpush1.msra.mxu0 %v665
    %715 = vmatprep.subr.mxu0 0.0
    %716 = vmatpush1.msra.mxu0 %v667
    %717 = vmatprep.subr.mxu0 0.0
    %718 = vmatpush1.msra.mxu0 0.0
    %719 = vmatprep.subr.mxu0 0.0
    %720 = vmatpush1.msra.mxu0 0.0
    %721 = vmatprep.subr.mxu0 0.0
    %722 = vmatpush1.msra.mxu0 0.0
    %723 = vmatprep.subr.mxu0 0.0
    %724 = vmatpush1.msra.mxu0 0.0
    %725 = vmatprep.subr.mxu0 0.0
    %726 = vmatpush1.msra.mxu0 0.0
    %727 = vmatprep.subr.mxu0 0.0
    %728 = vmatpush1.msra.mxu0 0.0
    %729 = vmatprep.subr.mxu0 0.0
    %730 = vmatpush1.msra.mxu0 0.0
    %731 = vmatprep.subr.mxu0 0.0
    %732 = vmatpush1.msra.mxu0 0.0
    %733 = vmatprep.subr.mxu0 0.0
    %734 = vmatpush1.msra.mxu0 0.0
    %735 = vmatprep.subr.mxu0 0.0
    %736 = vmatpush1.msra.mxu0 0.0
    %737 = vmatprep.subr.mxu0 0.0
    %738 = vmatpush1.msra.mxu0 0.0
    %739 = vmatprep.subr.mxu0 0.0
    %740 = vmatpush1.msra.mxu0 0.0
    %741 = vmatprep.subr.mxu0 0.0
    %742 = vmatpush1.msra.mxu0 0.0
    %743 = vmatprep.subr.mxu0 0.0
    %744 = vmatpush1.msra.mxu0 0.0
    %745 = vmatprep.subr.mxu0 0.0
    %746 = vmatpush1.msra.mxu0 0.0
    %747 = vmatprep.subr.mxu0 0.0
    %748 = vmatpush1.msra.mxu0 0.0
    %749 = vmatprep.subr.mxu0 0.0
    %750 = vmatpush1.msra.mxu0 0.0
    %751 = vmatprep.subr.mxu0 0.0
    %752 = vmatpush1.msra.mxu0 0.0
    %753 = vmatprep.subr.mxu0 0.0
    %754 = vmatpush1.msra.mxu0 0.0
    %755 = vmatprep.subr.mxu0 0.0
    %756 = vmatpush1.msra.mxu0 0.0
    %757 = vmatprep.subr.mxu0 0.0
    %758 = vmatpush1.msra.mxu0 0.0
    %759 = vmatprep.subr.mxu0 0.0
    %760 = vmatpush1.msra.mxu0 0.0
    %761 = vmatprep.subr.mxu0 0.0
    %762 = vmatpush1.msra.mxu0 0.0
    %763 = vmatprep.subr.mxu0 0.0
    %764 = vmatpush1.msra.mxu0 0.0
    %765 = vmatprep.mubr.f32.mxu0 0.0
    %766 = vmatmul.mubr.f32.gmra.mrb[0].mxu0 %v678
    %v767 = vpop.f32.mrb[0].mxu0
    %v768 = vadd.f32 0.0, %v767
    %v769 = vpop.f32.mrb[0].mxu0
    %770 = vmatprep.mubr.f32.mxu0 0.0
    %771 = vmatmul.mubr.f32.gmra.mrb[0].mxu0 %v681
    %v772 = vpop.f32.mrb[0].mxu0
    %v773 = vadd.f32 0.0, %v772
    %v774 = vpop.f32.mrb[0].mxu0
    %775 = vmatprep.mubr.f32.mxu0 0.0
    %776 = vmatmul.mubr.f32.gmra.mrb[0].mxu0 %v684
    %v777 = vpop.f32.mrb[0].mxu0
    %v778 = vadd.f32 0.0, %v777
    %v779 = vpop.f32.mrb[0].mxu0
    %780 = vmatprep.mubr.f32.mxu0 0.0
    %781 = vmatmul.mubr.f32.gmra.mrb[0].mxu0 %v687
    %v782 = vpop.f32.mrb[0].mxu0
    %v783 = vadd.f32 0.0, %v782
    %v784 = vpop.f32.mrb[0].mxu0
    %785 = vmatprep.mubr.f32.mxu0 0.0
    %786 = vmatmul.mubr.f32.gmra.mrb[0].mxu0 %v690
    %v787 = vpop.f32.mrb[0].mxu0
    %v788 = vadd.f32 0.0, %v787
    %v789 = vpop.f32.mrb[0].mxu0
    %790 = vmatprep.mubr.f32.mxu0 0.0
    %791 = vmatmul.mubr.f32.gmra.mrb[0].mxu0 %v693
    %v792 = vpop.f32.mrb[0].mxu0
    %v793 = vadd.f32 0.0, %v792
    %v794 = vpop.f32.mrb[0].mxu0
    %795 = vmatprep.mubr.f32.mxu0 0.0
    %796 = vmatmul.mubr.f32.gmra.mrb[0].mxu0 %v696
    %v797 = vpop.f32.mrb[0].mxu0
    %v798 = vadd.f32 0.0, %v797
    %v799 = vpop.f32.mrb[0].mxu0
    %800 = vmatprep.mubr.f32.mxu0 0.0
    %801 = vmatmul.mubr.f32.gmra.mrb[0].mxu0 %v699
    %v802 = vpop.f32.mrb[0].mxu0
    %v803 = vadd.f32 0.0, %v802
    %v804 = vpop.f32.mrb[0].mxu0
    %805 = vdwg.mxu0
    %v806 = vadd.f32 %v644, %v768
    %v807 = vadd.f32 %v645, %v773
    %v808 = vadd.f32 %v646, %v778
    %v809 = vadd.f32 %v647, %v783
    %v810 = vadd.f32 %v648, %v788
    %v811 = vadd.f32 %v649, %v793
    %v812 = vadd.f32 %v650, %v798
    %v813 = vadd.f32 %v651, %v803
    %814 = vrot.lane.b32.xlu0 %v28, 126
    %v815 = vpop.permute.xlu0 %814
    %816 = vrot.lane.b32.xlu0 %v29, 126
    %v817 = vpop.permute.xlu0 %816
    %818 = vrot.lane.b32.xlu0 %v30, 126
    %v819 = vpop.permute.xlu0 %818
    %820 = vrot.lane.b32.xlu0 %v31, 126
    %v821 = vpop.permute.xlu0 %820
    %822 = vrot.lane.b32.xlu0 %v32, 126
    %v823 = vpop.permute.xlu0 %822
    %824 = vrot.lane.b32.xlu0 %v33, 126
    %v825 = vpop.permute.xlu0 %824
    %826 = vrot.lane.b32.xlu0 %v34, 126
    %v827 = vpop.permute.xlu0 %826
    %828 = vrot.lane.b32.xlu0 %v35, 126
    %v829 = vpop.permute.xlu0 %828
    %s830 = scalar_lea.vmem [#allocation2], 320
    %v831 = vld [vmem:[%s830] sm:$0xff]
    %v832 = vld [vmem:[%s830 + $0x8] sm:$0xff]
    %v833 = vld [vmem:[%s830 + $0x10] sm:$0xff]
    %v834 = vld [vmem:[%s830 + $0x18] sm:$0xff]
    %v835 = vld [vmem:[%s830 + $0x20] sm:$0xff]
    %v836 = vld [vmem:[%s830 + $0x28] sm:$0xff]
    %v837 = vld [vmem:[%s830 + $0x30] sm:$0xff]
    %v838 = vld [vmem:[%s830 + $0x38] sm:$0xff]
    %v840 = vsel %vm85, %v831, 0
    %v843 = vsel %vm85, %v832, 0
    %v846 = vsel %vm85, %v833, 0
    %v849 = vsel %vm85, %v834, 0
    %v852 = vsel %vm85, %v835, 0
    %v855 = vsel %vm85, %v836, 0
    %v858 = vsel %vm85, %v837, 0
    %v861 = vsel %vm85, %v838, 0
    %863 = vmatprep.subr.mxu0 0.0
    %864 = vmatpush1.msra.mxu0 %v815
    %865 = vmatprep.subr.mxu0 0.0
    %866 = vmatpush1.msra.mxu0 %v817
    %867 = vmatprep.subr.mxu0 0.0
    %868 = vmatpush1.msra.mxu0 %v819
    %869 = vmatprep.subr.mxu0 0.0
    %870 = vmatpush1.msra.mxu0 %v821
    %871 = vmatprep.subr.mxu0 0.0
    %872 = vmatpush1.msra.mxu0 %v823
    %873 = vmatprep.subr.mxu0 0.0
    %874 = vmatpush1.msra.mxu0 %v825
    %875 = vmatprep.subr.mxu0 0.0
    %876 = vmatpush1.msra.mxu0 %v827
    %877 = vmatprep.subr.mxu0 0.0
    %878 = vmatpush1.msra.mxu0 %v829
    %879 = vmatprep.subr.mxu0 0.0
    %880 = vmatpush1.msra.mxu0 0.0
    %881 = vmatprep.subr.mxu0 0.0
    %882 = vmatpush1.msra.mxu0 0.0
    %883 = vmatprep.subr.mxu0 0.0
    %884 = vmatpush1.msra.mxu0 0.0
    %885 = vmatprep.subr.mxu0 0.0
    %886 = vmatpush1.msra.mxu0 0.0
    %887 = vmatprep.subr.mxu0 0.0
    %888 = vmatpush1.msra.mxu0 0.0
    %889 = vmatprep.subr.mxu0 0.0
    %890 = vmatpush1.msra.mxu0 0.0
    %891 = vmatprep.subr.mxu0 0.0
    %892 = vmatpush1.msra.mxu0 0.0
    %893 = vmatprep.subr.mxu0 0.0
    %894 = vmatpush1.msra.mxu0 0.0
    %895 = vmatprep.subr.mxu0 0.0
    %896 = vmatpush1.msra.mxu0 0.0
    %897 = vmatprep.subr.mxu0 0.0
    %898 = vmatpush1.msra.mxu0 0.0
    %899 = vmatprep.subr.mxu0 0.0
    %900 = vmatpush1.msra.mxu0 0.0
    %901 = vmatprep.subr.mxu0 0.0
    %902 = vmatpush1.msra.mxu0 0.0
    %903 = vmatprep.subr.mxu0 0.0
    %904 = vmatpush1.msra.mxu0 0.0
    %905 = vmatprep.subr.mxu0 0.0
    %906 = vmatpush1.msra.mxu0 0.0
    %907 = vmatprep.subr.mxu0 0.0
    %908 = vmatpush1.msra.mxu0 0.0
    %909 = vmatprep.subr.mxu0 0.0
    %910 = vmatpush1.msra.mxu0 0.0
    %911 = vmatprep.subr.mxu0 0.0
    %912 = vmatpush1.msra.mxu0 0.0
    %913 = vmatprep.subr.mxu0 0.0
    %914 = vmatpush1.msra.mxu0 0.0
    %915 = vmatprep.subr.mxu0 0.0
    %916 = vmatpush1.msra.mxu0 0.0
    %917 = vmatprep.subr.mxu0 0.0
    %918 = vmatpush1.msra.mxu0 0.0
    %919 = vmatprep.subr.mxu0 0.0
    %920 = vmatpush1.msra.mxu0 0.0
    %921 = vmatprep.subr.mxu0 0.0
    %922 = vmatpush1.msra.mxu0 0.0
    %923 = vmatprep.subr.mxu0 0.0
    %924 = vmatpush1.msra.mxu0 0.0
    %925 = vmatprep.subr.mxu0 0.0
    %926 = vmatpush1.msra.mxu0 0.0
    %927 = vmatprep.mubr.f32.mxu0 0.0
    %928 = vmatmul.mubr.f32.gmra.mrb[0].mxu0 %v840
    %v929 = vpop.f32.mrb[0].mxu0
    %v930 = vadd.f32 0.0, %v929
    %v931 = vpop.f32.mrb[0].mxu0
    %932 = vmatprep.mubr.f32.mxu0 0.0
    %933 = vmatmul.mubr.f32.gmra.mrb[0].mxu0 %v843
    %v934 = vpop.f32.mrb[0].mxu0
    %v935 = vadd.f32 0.0, %v934
    %v936 = vpop.f32.mrb[0].mxu0
    %937 = vmatprep.mubr.f32.mxu0 0.0
    %938 = vmatmul.mubr.f32.gmra.mrb[0].mxu0 %v846
    %v939 = vpop.f32.mrb[0].mxu0
    %v940 = vadd.f32 0.0, %v939
    %v941 = vpop.f32.mrb[0].mxu0
    %942 = vmatprep.mubr.f32.mxu0 0.0
    %943 = vmatmul.mubr.f32.gmra.mrb[0].mxu0 %v849
    %v944 = vpop.f32.mrb[0].mxu0
    %v945 = vadd.f32 0.0, %v944
    %v946 = vpop.f32.mrb[0].mxu0
    %947 = vmatprep.mubr.f32.mxu0 0.0
    %948 = vmatmul.mubr.f32.gmra.mrb[0].mxu0 %v852
    %v949 = vpop.f32.mrb[0].mxu0
    %v950 = vadd.f32 0.0, %v949
    %v951 = vpop.f32.mrb[0].mxu0
    %952 = vmatprep.mubr.f32.mxu0 0.0
    %953 = vmatmul.mubr.f32.gmra.mrb[0].mxu0 %v855
    %v954 = vpop.f32.mrb[0].mxu0
    %v955 = vadd.f32 0.0, %v954
    %v956 = vpop.f32.mrb[0].mxu0
    %957 = vmatprep.mubr.f32.mxu0 0.0
    %958 = vmatmul.mubr.f32.gmra.mrb[0].mxu0 %v858
    %v959 = vpop.f32.mrb[0].mxu0
    %v960 = vadd.f32 0.0, %v959
    %v961 = vpop.f32.mrb[0].mxu0
    %962 = vmatprep.mubr.f32.mxu0 0.0
    %963 = vmatmul.mubr.f32.gmra.mrb[0].mxu0 %v861
    %v964 = vpop.f32.mrb[0].mxu0
    %v965 = vadd.f32 0.0, %v964
    %v966 = vpop.f32.mrb[0].mxu0
    %967 = vdwg.mxu0
    %v968 = vadd.f32 %v806, %v930
    %v969 = vadd.f32 %v807, %v935
    %v970 = vadd.f32 %v808, %v940
    %v971 = vadd.f32 %v809, %v945
    %v972 = vadd.f32 %v810, %v950
    %v973 = vadd.f32 %v811, %v955
    %v974 = vadd.f32 %v812, %v960
    %v975 = vadd.f32 %v813, %v965
    %v976 = vld [vmem:[%s2] sm:$0xff]
    %v977 = vld [vmem:[%s2 + $0x8] sm:$0xff]
    %v978 = vld [vmem:[%s2 + $0x10] sm:$0xff]
    %v979 = vld [vmem:[%s2 + $0x18] sm:$0xff]
    %v980 = vld [vmem:[%s2 + $0x20] sm:$0xff]
    %v981 = vld [vmem:[%s2 + $0x28] sm:$0xff]
    %v982 = vld [vmem:[%s2 + $0x30] sm:$0xff]
    %v983 = vld [vmem:[%s2 + $0x38] sm:$0xff]
    %985 = vset.pattern.permute.xlu0 0
    %986 = vperm.xlu0 %985, %v976
    %v987 = vpop.permute.xlu0 %986
    %990 = vset.pattern.permute.xlu0 0
    %991 = vperm.xlu0 %990, %v977
    %v992 = vpop.permute.xlu0 %991
    %995 = vset.pattern.permute.xlu0 0
    %996 = vperm.xlu0 %995, %v978
    %v997 = vpop.permute.xlu0 %996
    %1000 = vset.pattern.permute.xlu0 0
    %1001 = vperm.xlu0 %1000, %v979
    %v1002 = vpop.permute.xlu0 %1001
    %1005 = vset.pattern.permute.xlu0 0
    %1006 = vperm.xlu0 %1005, %v980
    %v1007 = vpop.permute.xlu0 %1006
    %1010 = vset.pattern.permute.xlu0 0
    %1011 = vperm.xlu0 %1010, %v981
    %v1012 = vpop.permute.xlu0 %1011
    %1015 = vset.pattern.permute.xlu0 0
    %1016 = vperm.xlu0 %1015, %v982
    %v1017 = vpop.permute.xlu0 %1016
    %1020 = vset.pattern.permute.xlu0 0
    %1021 = vperm.xlu0 %1020, %v983
    %v1022 = vpop.permute.xlu0 %1021
    %v1024 = vadd.f32 %v968, %v987
    %v1025 = vadd.f32 %v969, %v992
    %v1026 = vadd.f32 %v970, %v997
    %v1027 = vadd.f32 %v971, %v1002
    %v1028 = vadd.f32 %v972, %v1007
    %v1029 = vadd.f32 %v973, %v1012
    %v1030 = vadd.f32 %v974, %v1017
    %v1031 = vadd.f32 %v975, %v1022
    %v1032 = vadd.f32 %v1024, 3.0
    %v1033 = vadd.f32 %v1025, 3.0
    %v1034 = vadd.f32 %v1026, 3.0
    %v1035 = vadd.f32 %v1027, 3.0
    %v1036 = vadd.f32 %v1028, 3.0
    %v1037 = vadd.f32 %v1029, 3.0
    %v1038 = vadd.f32 %v1030, 3.0
    %v1039 = vadd.f32 %v1031, 3.0
    %v1040 = vmax.f32 %v1032, 0.0
    %v1041 = vmax.f32 %v1033, 0.0
    %v1042 = vmax.f32 %v1034, 0.0
    %v1043 = vmax.f32 %v1035, 0.0
    %v1044 = vmax.f32 %v1036, 0.0
    %v1045 = vmax.f32 %v1037, 0.0
    %v1046 = vmax.f32 %v1038, 0.0
    %v1047 = vmax.f32 %v1039, 0.0
    %v1048 = vmin.f32 %v1040, 6.0
    %v1049 = vmin.f32 %v1041, 6.0
    %v1050 = vmin.f32 %v1042, 6.0
    %v1051 = vmin.f32 %v1043, 6.0
    %v1052 = vmin.f32 %v1044, 6.0
    %v1053 = vmin.f32 %v1045, 6.0
    %v1054 = vmin.f32 %v1046, 6.0
    %v1055 = vmin.f32 %v1047, 6.0
    %v1056 = vmul.f32 %v1024, %v1048
    %v1057 = vmul.f32 %v1025, %v1049
    %v1058 = vmul.f32 %v1026, %v1050
    %v1059 = vmul.f32 %v1027, %v1051
    %v1060 = vmul.f32 %v1028, %v1052
    %v1061 = vmul.f32 %v1029, %v1053
    %v1062 = vmul.f32 %v1030, %v1054
    %v1063 = vmul.f32 %v1031, %v1055
    %v1064 = vmul.f32 %v1056, 0.16666667
    %v1065 = vmul.f32 %v1057, 0.16666667
    %v1066 = vmul.f32 %v1058, 0.16666667
    %v1067 = vmul.f32 %v1059, 0.16666667
    %v1068 = vmul.f32 %v1060, 0.16666667
    %v1069 = vmul.f32 %v1061, 0.16666667
    %v1070 = vmul.f32 %v1062, 0.16666667
    %v1071 = vmul.f32 %v1063, 0.16666667
    %1072 = vst [vmem:[%s3] sm:$0xff] %v1064
    %1073 = vst [vmem:[%s3 + $0x8] sm:$0xff] %v1065
    %1074 = vst [vmem:[%s3 + $0x10] sm:$0xff] %v1066
    %1075 = vst [vmem:[%s3 + $0x18] sm:$0xff] %v1067
    %1076 = vst [vmem:[%s3 + $0x20] sm:$0xff] %v1068
    %1077 = vst [vmem:[%s3 + $0x28] sm:$0xff] %v1069
    %1078 = vst [vmem:[%s3 + $0x30] sm:$0xff] %v1070
    %1079 = vst [vmem:[%s3 + $0x38] sm:$0xff] %v1071
    // Predicated region
    $region18: #{model_forward.1} parent=1 // pred_check
      _
    $region19: #{model_forward.1} parent=1 // pred_check_branch
      %1081 = sbr.rel (0) target = $region21
    $region20: #{model_forward.1} parent=1 // pred_region
      _
    $region21: #{model_forward.1} parent=1 // pred_fallthru
      _
    // Predicated region
    $region22: #{model_forward.1} parent=1 // pred_check
      _
    $region23: #{model_forward.1} parent=1 // pred_check_branch
      %1083 = sbr.rel (0) target = $region25
    $region24: #{model_forward.1} parent=1 // pred_region
      _
    $region25: #{model_forward.1} parent=1 // pred_fallthru
      _
    %1084 = vsyncpa [#allocation3], 1

</llo_original>
